<compile_context>
chip_gen: v7x
topology: tpu7x:2x2x1
jax: 0.10.0
libtpu: 0.0.40
codegen_flags: <defaults>
</compile_context>

<pallas_src>
import jax
import jax.numpy as jnp
from jax import lax
from jax.experimental import pallas as pl
from jax.experimental.pallas import tpu as pltpu


def _round_up(x, m):
    return ((x + m - 1) // m) * m


def _pad2d(x, row_mult, col_mult):
    r = _round_up(x.shape[0], row_mult) - x.shape[0]
    c = _round_up(x.shape[1], col_mult) - x.shape[1]
    if r or c:
        x = jnp.pad(x, ((0, r), (0, c)))
    return x


def _discriminator_kernel(hp_ref, w_ref, b_ref, hm_ref, out_ref, z_ref):
    """One (TM, TN) output tile of  (h_pl @ W + b) @ h_mi^T.

    hp_ref : [TM, H]  row tile of h_pl
    w_ref  : [H,  H]  resident weight (already transposed: y = x @ W)
    b_ref  : [1,  H]  resident bias
    hm_ref : [TN, H]  row tile of h_mi (its rows become output columns)
    out_ref: [TM, TN]
    z_ref  : [TM, H]  VMEM scratch holding lin(h_pl) for the current row tile
    """
    # Compute the linear once per row tile; reuse it for every column tile
    # (j iterates fastest, so j == 0 marks a fresh row tile on each core).
    @pl.when(pl.program_id(1) == 0)
    def _():
        z_ref[...] = (
            jnp.dot(hp_ref[...], w_ref[...], preferred_element_type=jnp.float32)
            + b_ref[...]
        )

    # logits tile = z @ h_mi_tile^T : contract the feature axis of both
    # operands on the MXU, no explicit transpose needed.
    out_ref[...] = lax.dot_general(
        z_ref[...],
        hm_ref[...],
        dimension_numbers=(((1,), (1,)), ((), ())),
        preferred_element_type=jnp.float32,
    ).astype(out_ref.dtype)


def discriminator_forward(h_pl, h_mi, weight, bias, *, tm=128, tn=128):
    """logits = (h_pl @ weight.T + bias) @ h_mi.T  (PyTorch Linear + mm)."""
    assert h_pl.shape == h_mi.shape
    n, _ = h_pl.shape
    m = h_mi.shape[0]

    # Zero-pad to (8, 128)-aligned tiles so every block is lane-dense
    # (unmasked vst) and BlockSpec constraints hold.  Padded feature columns
    # contribute exact zeros to both matmuls; padded rows/cols of the output
    # are sliced off below.
    hp = _pad2d(h_pl.astype(jnp.float32), tm, 128)
    hm = _pad2d(h_mi.astype(jnp.float32), tn, 128)
    w_t = _pad2d(weight.T.astype(jnp.float32), 128, 128)        # y = x @ w_t
    b2 = _pad2d(bias.reshape(1, -1).astype(jnp.float32), 1, 128)

    n_pad, h_pad = hp.shape
    m_pad = hm.shape[0]
    # TODO(synk): feature dim is kept fully VMEM-resident (no K-reduction grid
    # axis); fine for n_h up to a few thousand, re-tile K beyond that.

    grid = (n_pad // tm, m_pad // tn)

    out_pad = pl.pallas_call(
        _discriminator_kernel,
        out_shape=jax.ShapeDtypeStruct((n_pad, m_pad), jnp.float32),
        grid_spec=pltpu.PrefetchScalarGridSpec(
            num_scalar_prefetch=0,
            grid=grid,
            in_specs=[
                pl.BlockSpec((tm, h_pad), lambda i, j: (i, 0)),     # h_pl row tile
                pl.BlockSpec((h_pad, h_pad), lambda i, j: (0, 0)),  # weight (resident)
                pl.BlockSpec((1, h_pad), lambda i, j: (0, 0)),      # bias (resident)
                pl.BlockSpec((tn, h_pad), lambda i, j: (j, 0)),     # h_mi row tile
            ],
            out_specs=pl.BlockSpec((tm, tn), lambda i, j: (i, j)),
            scratch_shapes=[pltpu.VMEM((tm, h_pad), jnp.float32)],
        ),
        compiler_params=pltpu.CompilerParams(
            dimension_semantics=("parallel", "arbitrary"),
        ),
    )(hp, w_t, b2, hm)

    return out_pad[:n, :m]


if __name__ == "__main__":
    key = jax.random.PRNGKey(0)
    k_pl, k_mi, k_w, k_b = jax.random.split(key, 4)

    n_h = 32      # hidden width of the Discriminator
    n_nodes = 8   # rows of h_pl / h_mi

    h_pl = jax.random.normal(k_pl, (n_nodes, n_h), jnp.float32)
    h_mi = jax.random.normal(k_mi, (n_nodes, n_h), jnp.float32)

    # nn.Linear(n_h, n_h) parameters (default PyTorch init style, deterministic).
    limit = 1.0 / (n_h ** 0.5)
    weight = jax.random.uniform(k_w, (n_h, n_h), jnp.float32, -limit, limit)
    bias = jax.random.uniform(k_b, (n_h,), jnp.float32, -limit, limit)

    logits = discriminator_forward(h_pl, h_mi, weight, bias)
    logits = jax.block_until_ready(logits)
    assert logits.shape == (n_nodes, n_nodes)

    # Pure-JAX reference check of the forward semantics.
    ref = (h_pl @ weight.T + bias) @ h_mi.T
    assert jnp.allclose(logits, ref, atol=1e-4, rtol=1e-4)
    assert bool(jnp.all(jnp.isfinite(logits)))
    print("KERNEL_OK")
</pallas_src>

<mosaic_0001>
module attributes {stable_mosaic.version = 11 : i64} {
  func.func @_discriminator_kernel(%arg0: i32, %arg1: i32, %arg2: memref<128x128xf32, #tpu.memory_space<vmem>>, %arg3: memref<128x128xf32, #tpu.memory_space<vmem>>, %arg4: memref<1x128xf32, #tpu.memory_space<vmem>>, %arg5: memref<128x128xf32, #tpu.memory_space<vmem>>, %arg6: memref<128x128xf32, #tpu.memory_space<vmem>>, %arg7: memref<128x128xf32, #tpu.memory_space<vmem>>) attributes {dimension_semantics = [#tpu.dimension_semantics<parallel>, #tpu.dimension_semantics<arbitrary>], iteration_bounds = array<i64: 1, 1>, scalar_prefetch = 0 : i64, scratch_operands = 1 : i64, tpu.core_type = #tpu.core_type<tc>, window_params = [{transform_indices = @transform_0, window_bounds = array<i64: 128, 128>}, {pipeline_mode = #tpu.pipeline_mode<synchronous>, transform_indices = @transform_1, window_bounds = array<i64: 128, 128>}, {pipeline_mode = #tpu.pipeline_mode<synchronous>, transform_indices = @transform_2, window_bounds = array<i64: 1, 128>}, {transform_indices = @transform_3, window_bounds = array<i64: 128, 128>}, {transform_indices = @transform_4, window_bounds = array<i64: 128, 128>}]} {
    %c0_i32 = arith.constant 0 : i32
    %0 = arith.cmpi eq, %arg1, %c0_i32 : i32
    %1 = arith.extui %0 : i1 to i32
    %c0_i32_0 = arith.constant 0 : i32
    %2 = arith.cmpi ne, %1, %c0_i32_0 : i32
    scf.if %2 {
      %c0_6 = arith.constant 0 : index
      %c0_7 = arith.constant 0 : index
      %7 = vector.load %arg2[%c0_6, %c0_7] : memref<128x128xf32, #tpu.memory_space<vmem>>, vector<128x128xf32>
      %c0_8 = arith.constant 0 : index
      %c0_9 = arith.constant 0 : index
      %8 = vector.load %arg3[%c0_8, %c0_9] : memref<128x128xf32, #tpu.memory_space<vmem>>, vector<128x128xf32>
      %cst_10 = arith.constant dense<0.000000e+00> : vector<128x128xf32>
      %9 = tpu.matmul %7, %8, %cst_10 {dimension_numbers = #tpu.dot_dimension_numbers<[1], [0], [0], [1], [0, 0, 1, 1], [], []>} : vector<128x128xf32>, vector<128x128xf32>, vector<128x128xf32> -> vector<128x128xf32>
      %c0_11 = arith.constant 0 : index
      %c0_12 = arith.constant 0 : index
      %10 = vector.load %arg4[%c0_11, %c0_12] : memref<1x128xf32, #tpu.memory_space<vmem>>, vector<1x128xf32>
      %11 = vector.broadcast %10 : vector<1x128xf32> to vector<128x128xf32>
      %12 = arith.addf %9, %11 : vector<128x128xf32>
      %c0_13 = arith.constant 0 : index
      %c0_14 = arith.constant 0 : index
      %13 = vector.load %arg7[%c0_13, %c0_14] : memref<128x128xf32, #tpu.memory_space<vmem>>, vector<128x128xf32>
      tpu.vector_store %arg7[%c0_13, %c0_14], %12 {strides = array<i32>} : memref<128x128xf32, #tpu.memory_space<vmem>>, vector<128x128xf32>,
    } else {
    }
    %c0 = arith.constant 0 : index
    %c0_1 = arith.constant 0 : index
    %3 = vector.load %arg7[%c0, %c0_1] : memref<128x128xf32, #tpu.memory_space<vmem>>, vector<128x128xf32>
    %c0_2 = arith.constant 0 : index
    %c0_3 = arith.constant 0 : index
    %4 = vector.load %arg5[%c0_2, %c0_3] : memref<128x128xf32, #tpu.memory_space<vmem>>, vector<128x128xf32>
    %cst = arith.constant dense<0.000000e+00> : vector<128x128xf32>
    %5 = tpu.matmul %3, %4, %cst {dimension_numbers = #tpu.dot_dimension_numbers<[1], [1], [0], [0], [0, 0, 1, 0], [], []>} : vector<128x128xf32>, vector<128x128xf32>, vector<128x128xf32> -> vector<128x128xf32>
    %c0_4 = arith.constant 0 : index
    %c0_5 = arith.constant 0 : index
    %6 = vector.load %arg6[%c0_4, %c0_5] : memref<128x128xf32, #tpu.memory_space<vmem>>, vector<128x128xf32>
    tpu.vector_store %arg6[%c0_4, %c0_5], %5 {strides = array<i32>} : memref<128x128xf32, #tpu.memory_space<vmem>>, vector<128x128xf32>,
    return
  }
  func.func @transform_0(%arg0: i32, %arg1: i32) -> (i32, i32) {
    %c0_i32 = arith.constant 0 : i32
    %c0_i32_0 = arith.constant 0 : i32
    return %arg0, %c0_i32 : i32, i32
  }
  func.func @transform_1(%arg0: i32, %arg1: i32) -> (i32, i32) {
    %c0_i32 = arith.constant 0 : i32
    %c0_i32_0 = arith.constant 0 : i32
    %c0_i32_1 = arith.constant 0 : i32
    return %c0_i32, %c0_i32_0 : i32, i32
  }
  func.func @transform_2(%arg0: i32, %arg1: i32) -> (i32, i32) {
    %c0_i32 = arith.constant 0 : i32
    %c0_i32_0 = arith.constant 0 : i32
    %c0_i32_1 = arith.constant 0 : i32
    return %c0_i32, %c0_i32_0 : i32, i32
  }
  func.func @transform_3(%arg0: i32, %arg1: i32) -> (i32, i32) {
    %c0_i32 = arith.constant 0 : i32
    %c0_i32_0 = arith.constant 0 : i32
    return %arg1, %c0_i32 : i32, i32
  }
  func.func @transform_4(%arg0: i32, %arg1: i32) -> (i32, i32) {
    %c0_i32 = arith.constant 0 : i32
    return %arg0, %arg1 : i32, i32
  }
}

</mosaic_0001>

<llo_original>
// kernel: tpu_custom_call.1
$region0: #{tpu_custom_call.1}
  #allocation0 [shape = 'u32[]', space=smem, size = 0x4, offset = 0x4, fixed_abs, tag = 'smem constant byte address 0x4 - core index']
  #allocation1 [shape = 'u32[144,128]{1,0:T(1,128)}', space=vmem, size = 0x12000, scoped, tag = 'internal scratch']
  #allocation2 [shape = 'f32[128,128]{1,0:T(8,128)}', space=vmem, size = 0x10000, scoped, tag = 'scratch operand']
  %s0 = inlined_call_operand.hbm [shape: f32[128,128], index: 0, kind: input, shape index: {}]
  %s1 = inlined_call_operand.hbm [shape: f32[128,128], index: 1, kind: input, shape index: {}]
  %s2 = inlined_call_operand.vmem [shape: f32[1,128], index: 2, kind: input, shape index: {}]
  %s3 = inlined_call_operand.hbm [shape: f32[128,128], index: 3, kind: input, shape index: {}]
  %s4 = inlined_call_operand.hbm [shape: f32[128,128], index: 4, kind: output, shape index: {}]
  %s5 = sld [smem:[#allocation0]]
  $region42: #{tpu_custom_call.1} parent=0
    _
  %s7 = ssub.s32 1, %s5
  %s8 = scalar_select 0, %s7, %s5
  $region1: #{tpu_custom_call.1} parent=0
    #allocation3 [shape = 'u8[65536]{0}', space=vmem, size = 0x10000, scoped, tag = 'input window, operand 0, single buffered']
    #allocation4 [shape = 's32[1]{0}', space=sflag, size = 0x4, scoped, tag = 'scoped memory for tpu_custom_call.1']
    #allocation5 [shape = 's32[1]{0}', space=sflag, size = 0x4, scoped, tag = 'scoped memory for tpu_custom_call.1']
    #allocation6 [shape = 'u8[65536]{0}', space=vmem, size = 0x10000, scoped, tag = 'input window, operand 1, single buffered']
    #allocation7 [shape = 's32[1]{0}', space=sflag, size = 0x4, scoped, tag = 'scoped memory for tpu_custom_call.1']
    #allocation8 [shape = 'u8[65536]{0}', space=vmem, size = 0x10000, scoped, tag = 'input window, operand 3, single buffered']
    #allocation9 [shape = 'u8[65536]{0}', space=vmem, size = 0x10000, scoped, tag = 'output window, operand 0, single buffered']
    %9 = vsyncpa [#allocation4], 0
    %10 = vsyncpa [#allocation7], 0
    %11 = vsyncpa [#allocation5], 0
    // Predicated region
    $region2: #{tpu_custom_call.1} parent=1 // pred_check
      _
    $region3: #{tpu_custom_call.1} parent=1 // pred_check_branch
      %13 = sbr.rel (0) target = $region5
    $region4: #{tpu_custom_call.1} parent=1 // pred_region
      %s15 = ssub.s32 2048, 2048
      %16 = vsyncadd [#allocation4], %s15
      %s17 = sshll.u32 [#allocation3], 4
      %s18 = int_to_ptr.vmem [resolvable:$true] %s17
      %23 = dma.hbm_to_vmem [thread:$0]  %s0, 2048, %s18, [#allocation4], 128, 128, 8
    $region5: #{tpu_custom_call.1} parent=1 // pred_fallthru
      _
    // Predicated region
    $region6: #{tpu_custom_call.1} parent=1 // pred_check
      _
    $region7: #{tpu_custom_call.1} parent=1 // pred_check_branch
      %25 = sbr.rel (0) target = $region9
    $region8: #{tpu_custom_call.1} parent=1 // pred_region
      %s27 = ssub.s32 2048, 2048
      %28 = vsyncadd [#allocation7], %s27
      %s29 = sshll.u32 [#allocation6], 4
      %s30 = int_to_ptr.vmem [resolvable:$true] %s29
      %35 = dma.hbm_to_vmem [thread:$0]  %s1, 2048, %s30, [#allocation7], 128, 128, 8
    $region9: #{tpu_custom_call.1} parent=1 // pred_fallthru
      _
    // Predicated region
    $region10: #{tpu_custom_call.1} parent=1 // pred_check
      _
    $region11: #{tpu_custom_call.1} parent=1 // pred_check_branch
      %37 = sbr.rel (0) target = $region13
    $region12: #{tpu_custom_call.1} parent=1 // pred_region
      _
    $region13: #{tpu_custom_call.1} parent=1 // pred_fallthru
      _
    // Predicated region
    $region14: #{tpu_custom_call.1} parent=1 // pred_check
      _
    $region15: #{tpu_custom_call.1} parent=1 // pred_check_branch
      %39 = sbr.rel (0) target = $region17
    $region16: #{tpu_custom_call.1} parent=1 // pred_region
      %s41 = ssub.s32 2048, 2048
      %42 = vsyncadd [#allocation7], %s41
      %s43 = sshll.u32 [#allocation8], 4
      %s44 = int_to_ptr.vmem [resolvable:$true] %s43
      %49 = dma.hbm_to_vmem [thread:$0]  %s3, 2048, %s44, [#allocation7], 128, 128, 8
    $region17: #{tpu_custom_call.1} parent=1 // pred_fallthru
      _
    // Predicated region
    $region18: #{tpu_custom_call.1} parent=1 // pred_check
      _
    $region19: #{tpu_custom_call.1} parent=1 // pred_check_branch
      %51 = sbr.rel (0) target = $region21
    $region20: #{tpu_custom_call.1} parent=1 // pred_region
      %52 = dma.done [#allocation4], 2048
    $region21: #{tpu_custom_call.1} parent=1 // pred_fallthru
      _
    // Predicated region
    $region22: #{tpu_custom_call.1} parent=1 // pred_check
      _
    $region23: #{tpu_custom_call.1} parent=1 // pred_check_branch
      %54 = sbr.rel (0) target = $region25
    $region24: #{tpu_custom_call.1} parent=1 // pred_region
      %55 = dma.done [#allocation7], 2048
    $region25: #{tpu_custom_call.1} parent=1 // pred_fallthru
      _
    // Predicated region
    $region26: #{tpu_custom_call.1} parent=1 // pred_check
      _
    $region27: #{tpu_custom_call.1} parent=1 // pred_check_branch
      %57 = sbr.rel (0) target = $region29
    $region28: #{tpu_custom_call.1} parent=1 // pred_region
      %58 = dma.done [#allocation7], 2048
    $region29: #{tpu_custom_call.1} parent=1 // pred_fallthru
      _
    %p59 = scmp.eq.s32.totalorder 0, 0
    // Predicated region
    $region30: #{tpu_custom_call.1} parent=1 // pred_check
      %p60 = pneg %p59
    $region31: #{tpu_custom_call.1} parent=1 // pred_check_branch
      %62 = sbr.rel (%p60) target = $region33
    $region32: #{tpu_custom_call.1} parent=1 // pred_region
      %v63 = vld [vmem:[#allocation3] sm:$0xff]
      %v64 = vld [vmem:[#allocation3 + $0x8] sm:$0xff]
      %v65 = vld [vmem:[#allocation3 + $0x10] sm:$0xff]
      %v66 = vld [vmem:[#allocation3 + $0x18] sm:$0xff]
      %v67 = vld [vmem:[#allocation3 + $0x20] sm:$0xff]
      %v68 = vld [vmem:[#allocation3 + $0x28] sm:$0xff]
      %v69 = vld [vmem:[#allocation3 + $0x30] sm:$0xff]
      %v70 = vld [vmem:[#allocation3 + $0x38] sm:$0xff]
      %v71 = vld [vmem:[#allocation3 + $0x40] sm:$0xff]
      %v72 = vld [vmem:[#allocation3 + $0x48] sm:$0xff]
      %v73 = vld [vmem:[#allocation3 + $0x50] sm:$0xff]
      %v74 = vld [vmem:[#allocation3 + $0x58] sm:$0xff]
      %v75 = vld [vmem:[#allocation3 + $0x60] sm:$0xff]
      %v76 = vld [vmem:[#allocation3 + $0x68] sm:$0xff]
      %v77 = vld [vmem:[#allocation3 + $0x70] sm:$0xff]
      %v78 = vld [vmem:[#allocation3 + $0x78] sm:$0xff]
      %v79 = vld [vmem:[#allocation6] sm:$0xff]
      %v80 = vld [vmem:[#allocation6 + $0x8] sm:$0xff]
      %v81 = vld [vmem:[#allocation6 + $0x10] sm:$0xff]
      %v82 = vld [vmem:[#allocation6 + $0x18] sm:$0xff]
      %v83 = vld [vmem:[#allocation6 + $0x20] sm:$0xff]
      %v84 = vld [vmem:[#allocation6 + $0x28] sm:$0xff]
      %v85 = vld [vmem:[#allocation6 + $0x30] sm:$0xff]
      %v86 = vld [vmem:[#allocation6 + $0x38] sm:$0xff]
      %v87 = vld [vmem:[#allocation6 + $0x40] sm:$0xff]
      %v88 = vld [vmem:[#allocation6 + $0x48] sm:$0xff]
      %v89 = vld [vmem:[#allocation6 + $0x50] sm:$0xff]
      %v90 = vld [vmem:[#allocation6 + $0x58] sm:$0xff]
      %v91 = vld [vmem:[#allocation6 + $0x60] sm:$0xff]
      %v92 = vld [vmem:[#allocation6 + $0x68] sm:$0xff]
      %v93 = vld [vmem:[#allocation6 + $0x70] sm:$0xff]
      %v94 = vld [vmem:[#allocation6 + $0x78] sm:$0xff]
      %v95 = vld [vmem:[%s2] sm:$0x1]
      %v97 = vlaneseq
      %v98 = vshrl.u32 %v97, 7
      %v99 = vsub.s32 0, %v98
      %v100 = vrot.slane %v95, %v99
      %102 = vmatprep.subr.mxu0 0.0
      %103 = vmatpush1.msra.mxu0 %v79
      %104 = vmatprep.subr.mxu0 0.0
      %105 = vmatpush1.msra.mxu0 %v80
      %106 = vmatprep.subr.mxu0 0.0
      %107 = vmatpush1.msra.mxu0 %v81
      %108 = vmatprep.subr.mxu0 0.0
      %109 = vmatpush1.msra.mxu0 %v82
      %110 = vmatprep.subr.mxu0 0.0
      %111 = vmatpush1.msra.mxu0 %v83
      %112 = vmatprep.subr.mxu0 0.0
      %113 = vmatpush1.msra.mxu0 %v84
      %114 = vmatprep.subr.mxu0 0.0
      %115 = vmatpush1.msra.mxu0 %v85
      %116 = vmatprep.subr.mxu0 0.0
      %117 = vmatpush1.msra.mxu0 %v86
      %118 = vmatprep.subr.mxu0 0.0
      %119 = vmatpush1.msra.mxu0 %v87
      %120 = vmatprep.subr.mxu0 0.0
      %121 = vmatpush1.msra.mxu0 %v88
      %122 = vmatprep.subr.mxu0 0.0
      %123 = vmatpush1.msra.mxu0 %v89
      %124 = vmatprep.subr.mxu0 0.0
      %125 = vmatpush1.msra.mxu0 %v90
      %126 = vmatprep.subr.mxu0 0.0
      %127 = vmatpush1.msra.mxu0 %v91
      %128 = vmatprep.subr.mxu0 0.0
      %129 = vmatpush1.msra.mxu0 %v92
      %130 = vmatprep.subr.mxu0 0.0
      %131 = vmatpush1.msra.mxu0 %v93
      %132 = vmatprep.subr.mxu0 0.0
      %133 = vmatpush1.msra.mxu0 %v94
      %134 = vmatprep.subr.mxu0 0.0
      %135 = vmatpush1.msra.mxu0 0.0
      %136 = vmatprep.subr.mxu0 0.0
      %137 = vmatpush1.msra.mxu0 0.0
      %138 = vmatprep.subr.mxu0 0.0
      %139 = vmatpush1.msra.mxu0 0.0
      %140 = vmatprep.subr.mxu0 0.0
      %141 = vmatpush1.msra.mxu0 0.0
      %142 = vmatprep.subr.mxu0 0.0
      %143 = vmatpush1.msra.mxu0 0.0
      %144 = vmatprep.subr.mxu0 0.0
      %145 = vmatpush1.msra.mxu0 0.0
      %146 = vmatprep.subr.mxu0 0.0
      %147 = vmatpush1.msra.mxu0 0.0
      %148 = vmatprep.subr.mxu0 0.0
      %149 = vmatpush1.msra.mxu0 0.0
      %150 = vmatprep.subr.mxu0 0.0
      %151 = vmatpush1.msra.mxu0 0.0
      %152 = vmatprep.subr.mxu0 0.0
      %153 = vmatpush1.msra.mxu0 0.0
      %154 = vmatprep.subr.mxu0 0.0
      %155 = vmatpush1.msra.mxu0 0.0
      %156 = vmatprep.subr.mxu0 0.0
      %157 = vmatpush1.msra.mxu0 0.0
      %158 = vmatprep.subr.mxu0 0.0
      %159 = vmatpush1.msra.mxu0 0.0
      %160 = vmatprep.subr.mxu0 0.0
      %161 = vmatpush1.msra.mxu0 0.0
      %162 = vmatprep.subr.mxu0 0.0
      %163 = vmatpush1.msra.mxu0 0.0
      %164 = vmatprep.subr.mxu0 0.0
      %165 = vmatpush1.msra.mxu0 0.0
      %166 = vmatprep.mubr.f32.mxu0 0.0
      %167 = vmatmul.mubr.f32.gmra.mrb[0].mxu0 %v63
      %v168 = vpop.f32.mrb[0].mxu0
      %v169 = vadd.f32 %v100, %v168
      %v170 = vpop.f32.mrb[0].mxu0
      %171 = vmatprep.mubr.f32.mxu0 0.0
      %172 = vmatmul.mubr.f32.gmra.mrb[0].mxu0 %v64
      %v173 = vpop.f32.mrb[0].mxu0
      %v174 = vadd.f32 %v100, %v173
      %v175 = vpop.f32.mrb[0].mxu0
      %176 = vmatprep.mubr.f32.mxu0 0.0
      %177 = vmatmul.mubr.f32.gmra.mrb[0].mxu0 %v65
      %v178 = vpop.f32.mrb[0].mxu0
      %v179 = vadd.f32 %v100, %v178
      %v180 = vpop.f32.mrb[0].mxu0
      %181 = vmatprep.mubr.f32.mxu0 0.0
      %182 = vmatmul.mubr.f32.gmra.mrb[0].mxu0 %v66
      %v183 = vpop.f32.mrb[0].mxu0
      %v184 = vadd.f32 %v100, %v183
      %v185 = vpop.f32.mrb[0].mxu0
      %186 = vmatprep.mubr.f32.mxu0 0.0
      %187 = vmatmul.mubr.f32.gmra.mrb[0].mxu0 %v67
      %v188 = vpop.f32.mrb[0].mxu0
      %v189 = vadd.f32 %v100, %v188
      %v190 = vpop.f32.mrb[0].mxu0
      %191 = vmatprep.mubr.f32.mxu0 0.0
      %192 = vmatmul.mubr.f32.gmra.mrb[0].mxu0 %v68
      %v193 = vpop.f32.mrb[0].mxu0
      %v194 = vadd.f32 %v100, %v193
      %v195 = vpop.f32.mrb[0].mxu0
      %196 = vmatprep.mubr.f32.mxu0 0.0
      %197 = vmatmul.mubr.f32.gmra.mrb[0].mxu0 %v69
      %v198 = vpop.f32.mrb[0].mxu0
      %v199 = vadd.f32 %v100, %v198
      %v200 = vpop.f32.mrb[0].mxu0
      %201 = vmatprep.mubr.f32.mxu0 0.0
      %202 = vmatmul.mubr.f32.gmra.mrb[0].mxu0 %v70
      %v203 = vpop.f32.mrb[0].mxu0
      %v204 = vadd.f32 %v100, %v203
      %v205 = vpop.f32.mrb[0].mxu0
      %206 = vmatprep.mubr.f32.mxu0 0.0
      %207 = vmatmul.mubr.f32.gmra.mrb[0].mxu0 %v71
      %v208 = vpop.f32.mrb[0].mxu0
      %v209 = vadd.f32 %v100, %v208
      %v210 = vpop.f32.mrb[0].mxu0
      %211 = vmatprep.mubr.f32.mxu0 0.0
      %212 = vmatmul.mubr.f32.gmra.mrb[0].mxu0 %v72
      %v213 = vpop.f32.mrb[0].mxu0
      %v214 = vadd.f32 %v100, %v213
      %v215 = vpop.f32.mrb[0].mxu0
      %216 = vmatprep.mubr.f32.mxu0 0.0
      %217 = vmatmul.mubr.f32.gmra.mrb[0].mxu0 %v73
      %v218 = vpop.f32.mrb[0].mxu0
      %v219 = vadd.f32 %v100, %v218
      %v220 = vpop.f32.mrb[0].mxu0
      %221 = vmatprep.mubr.f32.mxu0 0.0
      %222 = vmatmul.mubr.f32.gmra.mrb[0].mxu0 %v74
      %v223 = vpop.f32.mrb[0].mxu0
      %v224 = vadd.f32 %v100, %v223
      %v225 = vpop.f32.mrb[0].mxu0
      %226 = vmatprep.mubr.f32.mxu0 0.0
      %227 = vmatmul.mubr.f32.gmra.mrb[0].mxu0 %v75
      %v228 = vpop.f32.mrb[0].mxu0
      %v229 = vadd.f32 %v100, %v228
      %v230 = vpop.f32.mrb[0].mxu0
      %231 = vmatprep.mubr.f32.mxu0 0.0
      %232 = vmatmul.mubr.f32.gmra.mrb[0].mxu0 %v76
      %v233 = vpop.f32.mrb[0].mxu0
      %v234 = vadd.f32 %v100, %v233
      %v235 = vpop.f32.mrb[0].mxu0
      %236 = vmatprep.mubr.f32.mxu0 0.0
      %237 = vmatmul.mubr.f32.gmra.mrb[0].mxu0 %v77
      %v238 = vpop.f32.mrb[0].mxu0
      %v239 = vadd.f32 %v100, %v238
      %v240 = vpop.f32.mrb[0].mxu0
      %241 = vmatprep.mubr.f32.mxu0 0.0
      %242 = vmatmul.mubr.f32.gmra.mrb[0].mxu0 %v78
      %v243 = vpop.f32.mrb[0].mxu0
      %v244 = vadd.f32 %v100, %v243
      %v245 = vpop.f32.mrb[0].mxu0
      %246 = vdwg.mxu0
      %247 = vst [vmem:[#allocation2] sm:$0xff] %v169
      %248 = vst [vmem:[#allocation2 + $0x8] sm:$0xff] %v174
      %249 = vst [vmem:[#allocation2 + $0x10] sm:$0xff] %v179
      %250 = vst [vmem:[#allocation2 + $0x18] sm:$0xff] %v184
      %251 = vst [vmem:[#allocation2 + $0x20] sm:$0xff] %v189
      %252 = vst [vmem:[#allocation2 + $0x28] sm:$0xff] %v194
      %253 = vst [vmem:[#allocation2 + $0x30] sm:$0xff] %v199
      %254 = vst [vmem:[#allocation2 + $0x38] sm:$0xff] %v204
      %255 = vst [vmem:[#allocation2 + $0x40] sm:$0xff] %v209
      %256 = vst [vmem:[#allocation2 + $0x48] sm:$0xff] %v214
      %257 = vst [vmem:[#allocation2 + $0x50] sm:$0xff] %v219
      %258 = vst [vmem:[#allocation2 + $0x58] sm:$0xff] %v224
      %259 = vst [vmem:[#allocation2 + $0x60] sm:$0xff] %v229
      %260 = vst [vmem:[#allocation2 + $0x68] sm:$0xff] %v234
      %261 = vst [vmem:[#allocation2 + $0x70] sm:$0xff] %v239
      %262 = vst [vmem:[#allocation2 + $0x78] sm:$0xff] %v244
    $region33: #{tpu_custom_call.1} parent=1 // pred_fallthru
      _
    %v263 = vld [vmem:[#allocation2] sm:$0xff]
    %v264 = vld [vmem:[#allocation2 + $0x8] sm:$0xff]
    %v265 = vld [vmem:[#allocation2 + $0x10] sm:$0xff]
    %v266 = vld [vmem:[#allocation2 + $0x18] sm:$0xff]
    %v267 = vld [vmem:[#allocation2 + $0x20] sm:$0xff]
    %v268 = vld [vmem:[#allocation2 + $0x28] sm:$0xff]
    %v269 = vld [vmem:[#allocation2 + $0x30] sm:$0xff]
    %v270 = vld [vmem:[#allocation2 + $0x38] sm:$0xff]
    %v271 = vld [vmem:[#allocation2 + $0x40] sm:$0xff]
    %v272 = vld [vmem:[#allocation2 + $0x48] sm:$0xff]
    %v273 = vld [vmem:[#allocation2 + $0x50] sm:$0xff]
    %v274 = vld [vmem:[#allocation2 + $0x58] sm:$0xff]
    %v275 = vld [vmem:[#allocation2 + $0x60] sm:$0xff]
    %v276 = vld [vmem:[#allocation2 + $0x68] sm:$0xff]
    %v277 = vld [vmem:[#allocation2 + $0x70] sm:$0xff]
    %v278 = vld [vmem:[#allocation2 + $0x78] sm:$0xff]
    %v279 = vld [vmem:[#allocation8] sm:$0xff]
    %v280 = vld [vmem:[#allocation8 + $0x8] sm:$0xff]
    %v281 = vld [vmem:[#allocation8 + $0x10] sm:$0xff]
    %v282 = vld [vmem:[#allocation8 + $0x18] sm:$0xff]
    %v283 = vld [vmem:[#allocation8 + $0x20] sm:$0xff]
    %v284 = vld [vmem:[#allocation8 + $0x28] sm:$0xff]
    %v285 = vld [vmem:[#allocation8 + $0x30] sm:$0xff]
    %v286 = vld [vmem:[#allocation8 + $0x38] sm:$0xff]
    %v287 = vld [vmem:[#allocation8 + $0x40] sm:$0xff]
    %v288 = vld [vmem:[#allocation8 + $0x48] sm:$0xff]
    %v289 = vld [vmem:[#allocation8 + $0x50] sm:$0xff]
    %v290 = vld [vmem:[#allocation8 + $0x58] sm:$0xff]
    %v291 = vld [vmem:[#allocation8 + $0x60] sm:$0xff]
    %v292 = vld [vmem:[#allocation8 + $0x68] sm:$0xff]
    %v293 = vld [vmem:[#allocation8 + $0x70] sm:$0xff]
    %v294 = vld [vmem:[#allocation8 + $0x78] sm:$0xff]
    %295 = vmatprep.subr.mxu0 0.0
    %296 = vmatpush1.xpose.msra.mxu0 %v279
    %297 = vmatprep.subr.mxu0 0.0
    %298 = vmatpush1.xpose.msra.mxu0 %v280
    %299 = vmatprep.subr.mxu0 0.0
    %300 = vmatpush1.xpose.msra.mxu0 %v281
    %301 = vmatprep.subr.mxu0 0.0
    %302 = vmatpush1.xpose.msra.mxu0 %v282
    %303 = vmatprep.subr.mxu0 0.0
    %304 = vmatpush1.xpose.msra.mxu0 %v283
    %305 = vmatprep.subr.mxu0 0.0
    %306 = vmatpush1.xpose.msra.mxu0 %v284
    %307 = vmatprep.subr.mxu0 0.0
    %308 = vmatpush1.xpose.msra.mxu0 %v285
    %309 = vmatprep.subr.mxu0 0.0
    %310 = vmatpush1.xpose.msra.mxu0 %v286
    %311 = vmatprep.subr.mxu0 0.0
    %312 = vmatpush1.xpose.msra.mxu0 %v287
    %313 = vmatprep.subr.mxu0 0.0
    %314 = vmatpush1.xpose.msra.mxu0 %v288
    %315 = vmatprep.subr.mxu0 0.0
    %316 = vmatpush1.xpose.msra.mxu0 %v289
    %317 = vmatprep.subr.mxu0 0.0
    %318 = vmatpush1.xpose.msra.mxu0 %v290
    %319 = vmatprep.subr.mxu0 0.0
    %320 = vmatpush1.xpose.msra.mxu0 %v291
    %321 = vmatprep.subr.mxu0 0.0
    %322 = vmatpush1.xpose.msra.mxu0 %v292
    %323 = vmatprep.subr.mxu0 0.0
    %324 = vmatpush1.xpose.msra.mxu0 %v293
    %325 = vmatprep.subr.mxu0 0.0
    %326 = vmatpush1.xpose.msra.mxu0 %v294
    %327 = vmatprep.subr.mxu0 0.0
    %328 = vmatpush1.xpose.msra.mxu0 0.0
    %329 = vmatprep.subr.mxu0 0.0
    %330 = vmatpush1.xpose.msra.mxu0 0.0
    %331 = vmatprep.subr.mxu0 0.0
    %332 = vmatpush1.xpose.msra.mxu0 0.0
    %333 = vmatprep.subr.mxu0 0.0
    %334 = vmatpush1.xpose.msra.mxu0 0.0
    %335 = vmatprep.subr.mxu0 0.0
    %336 = vmatpush1.xpose.msra.mxu0 0.0
    %337 = vmatprep.subr.mxu0 0.0
    %338 = vmatpush1.xpose.msra.mxu0 0.0
    %339 = vmatprep.subr.mxu0 0.0
    %340 = vmatpush1.xpose.msra.mxu0 0.0
    %341 = vmatprep.subr.mxu0 0.0
    %342 = vmatpush1.xpose.msra.mxu0 0.0
    %343 = vmatprep.subr.mxu0 0.0
    %344 = vmatpush1.xpose.msra.mxu0 0.0
    %345 = vmatprep.subr.mxu0 0.0
    %346 = vmatpush1.xpose.msra.mxu0 0.0
    %347 = vmatprep.subr.mxu0 0.0
    %348 = vmatpush1.xpose.msra.mxu0 0.0
    %349 = vmatprep.subr.mxu0 0.0
    %350 = vmatpush1.xpose.msra.mxu0 0.0
    %351 = vmatprep.subr.mxu0 0.0
    %352 = vmatpush1.xpose.msra.mxu0 0.0
    %353 = vmatprep.subr.mxu0 0.0
    %354 = vmatpush1.xpose.msra.mxu0 0.0
    %355 = vmatprep.subr.mxu0 0.0
    %356 = vmatpush1.xpose.msra.mxu0 0.0
    %357 = vmatprep.subr.mxu0 0.0
    %358 = vmatpush1.xpose.msra.mxu0 0.0
    %359 = vmatprep.mubr.f32.mxu0 0.0
    %360 = vmatmul.mubr.f32.gmra.mrb[0].mxu0 %v263
    %v361 = vpop.f32.mrb[0].mxu0
    %v362 = vadd.f32 0.0, %v361
    %v363 = vpop.f32.mrb[0].mxu0
    %364 = vmatprep.mubr.f32.mxu0 0.0
    %365 = vmatmul.mubr.f32.gmra.mrb[0].mxu0 %v264
    %v366 = vpop.f32.mrb[0].mxu0
    %v367 = vadd.f32 0.0, %v366
    %v368 = vpop.f32.mrb[0].mxu0
    %369 = vmatprep.mubr.f32.mxu0 0.0
    %370 = vmatmul.mubr.f32.gmra.mrb[0].mxu0 %v265
    %v371 = vpop.f32.mrb[0].mxu0
    %v372 = vadd.f32 0.0, %v371
    %v373 = vpop.f32.mrb[0].mxu0
    %374 = vmatprep.mubr.f32.mxu0 0.0
    %375 = vmatmul.mubr.f32.gmra.mrb[0].mxu0 %v266
    %v376 = vpop.f32.mrb[0].mxu0
    %v377 = vadd.f32 0.0, %v376
    %v378 = vpop.f32.mrb[0].mxu0
    %379 = vmatprep.mubr.f32.mxu0 0.0
    %380 = vmatmul.mubr.f32.gmra.mrb[0].mxu0 %v267
    %v381 = vpop.f32.mrb[0].mxu0
    %v382 = vadd.f32 0.0, %v381
    %v383 = vpop.f32.mrb[0].mxu0
    %384 = vmatprep.mubr.f32.mxu0 0.0
    %385 = vmatmul.mubr.f32.gmra.mrb[0].mxu0 %v268
    %v386 = vpop.f32.mrb[0].mxu0
    %v387 = vadd.f32 0.0, %v386
    %v388 = vpop.f32.mrb[0].mxu0
    %389 = vmatprep.mubr.f32.mxu0 0.0
    %390 = vmatmul.mubr.f32.gmra.mrb[0].mxu0 %v269
    %v391 = vpop.f32.mrb[0].mxu0
    %v392 = vadd.f32 0.0, %v391
    %v393 = vpop.f32.mrb[0].mxu0
    %394 = vmatprep.mubr.f32.mxu0 0.0
    %395 = vmatmul.mubr.f32.gmra.mrb[0].mxu0 %v270
    %v396 = vpop.f32.mrb[0].mxu0
    %v397 = vadd.f32 0.0, %v396
    %v398 = vpop.f32.mrb[0].mxu0
    %399 = vmatprep.mubr.f32.mxu0 0.0
    %400 = vmatmul.mubr.f32.gmra.mrb[0].mxu0 %v271
    %v401 = vpop.f32.mrb[0].mxu0
    %v402 = vadd.f32 0.0, %v401
    %v403 = vpop.f32.mrb[0].mxu0
    %404 = vmatprep.mubr.f32.mxu0 0.0
    %405 = vmatmul.mubr.f32.gmra.mrb[0].mxu0 %v272
    %v406 = vpop.f32.mrb[0].mxu0
    %v407 = vadd.f32 0.0, %v406
    %v408 = vpop.f32.mrb[0].mxu0
    %409 = vmatprep.mubr.f32.mxu0 0.0
    %410 = vmatmul.mubr.f32.gmra.mrb[0].mxu0 %v273
    %v411 = vpop.f32.mrb[0].mxu0
    %v412 = vadd.f32 0.0, %v411
    %v413 = vpop.f32.mrb[0].mxu0
    %414 = vmatprep.mubr.f32.mxu0 0.0
    %415 = vmatmul.mubr.f32.gmra.mrb[0].mxu0 %v274
    %v416 = vpop.f32.mrb[0].mxu0
    %v417 = vadd.f32 0.0, %v416
    %v418 = vpop.f32.mrb[0].mxu0
    %419 = vmatprep.mubr.f32.mxu0 0.0
    %420 = vmatmul.mubr.f32.gmra.mrb[0].mxu0 %v275
    %v421 = vpop.f32.mrb[0].mxu0
    %v422 = vadd.f32 0.0, %v421
    %v423 = vpop.f32.mrb[0].mxu0
    %424 = vmatprep.mubr.f32.mxu0 0.0
    %425 = vmatmul.mubr.f32.gmra.mrb[0].mxu0 %v276
    %v426 = vpop.f32.mrb[0].mxu0
    %v427 = vadd.f32 0.0, %v426
    %v428 = vpop.f32.mrb[0].mxu0
    %429 = vmatprep.mubr.f32.mxu0 0.0
    %430 = vmatmul.mubr.f32.gmra.mrb[0].mxu0 %v277
    %v431 = vpop.f32.mrb[0].mxu0
    %v432 = vadd.f32 0.0, %v431
    %v433 = vpop.f32.mrb[0].mxu0
    %434 = vmatprep.mubr.f32.mxu0 0.0
    %435 = vmatmul.mubr.f32.gmra.mrb[0].mxu0 %v278
    %v436 = vpop.f32.mrb[0].mxu0
    %v437 = vadd.f32 0.0, %v436
    %v438 = vpop.f32.mrb[0].mxu0
    %439 = vdwg.mxu0
    %440 = vst [vmem:[#allocation9] sm:$0xff] %v362
    %441 = vst [vmem:[#allocation9 + $0x8] sm:$0xff] %v367
    %442 = vst [vmem:[#allocation9 + $0x10] sm:$0xff] %v372
    %443 = vst [vmem:[#allocation9 + $0x18] sm:$0xff] %v377
    %444 = vst [vmem:[#allocation9 + $0x20] sm:$0xff] %v382
    %445 = vst [vmem:[#allocation9 + $0x28] sm:$0xff] %v387
    %446 = vst [vmem:[#allocation9 + $0x30] sm:$0xff] %v392
    %447 = vst [vmem:[#allocation9 + $0x38] sm:$0xff] %v397
    %448 = vst [vmem:[#allocation9 + $0x40] sm:$0xff] %v402
    %449 = vst [vmem:[#allocation9 + $0x48] sm:$0xff] %v407
    %450 = vst [vmem:[#allocation9 + $0x50] sm:$0xff] %v412
    %451 = vst [vmem:[#allocation9 + $0x58] sm:$0xff] %v417
    %452 = vst [vmem:[#allocation9 + $0x60] sm:$0xff] %v422
    %453 = vst [vmem:[#allocation9 + $0x68] sm:$0xff] %v427
    %454 = vst [vmem:[#allocation9 + $0x70] sm:$0xff] %v432
    %455 = vst [vmem:[#allocation9 + $0x78] sm:$0xff] %v437
    // Predicated region
    $region34: #{tpu_custom_call.1} parent=1 // pred_check
      _
    $region35: #{tpu_custom_call.1} parent=1 // pred_check_branch
      %457 = sbr.rel (0) target = $region37
    $region36: #{tpu_custom_call.1} parent=1 // pred_region
      %s459 = ssub.s32 2048, 2048
      %460 = vsyncadd [#allocation5], %s459
      %s461 = sshll.u32 [#allocation9], 4
      %s462 = int_to_ptr.vmem [resolvable:$true] %s461
      %467 = dma.vmem_to_hbm [thread:$0]  %s462, 2048, %s4, [#allocation5], 128, 128, 8
    $region37: #{tpu_custom_call.1} parent=1 // pred_fallthru
      _
    // Predicated region
    $region38: #{tpu_custom_call.1} parent=1 // pred_check
      _
    $region39: #{tpu_custom_call.1} parent=1 // pred_check_branch
      %469 = sbr.rel (0) target = $region41
    $region40: #{tpu_custom_call.1} parent=1 // pred_region
      %470 = dma.done [#allocation5], 2048
    $region41: #{tpu_custom_call.1} parent=1 // pred_fallthru
      _
    %471 = vsyncpa [#allocation4], 1
    %472 = vsyncpa [#allocation7], 1
    %473 = vsyncpa [#allocation5], 1

</llo_original>
